<compile_context>
chip_gen: v5e
topology: v5e:2x2
jax: 0.10.0
libtpu: 0.0.40
codegen_flags: <defaults>
</compile_context>

<pallas_src>
import functools

import jax
import jax.numpy as jnp
from jax.experimental import pallas as pl
from jax.experimental.pallas import tpu as pltpu

_LANES = 128
_MAX_BLOCK_ROWS = 4096      # (4096, 128) f32 = 2 MiB per input block


def _round_up(a, b):
    return (a + b - 1) // b * b


def _sublane_multiple(dtype):
    # Packed min-tile rows: f32 -> 8, bf16 -> 16, int8/bool -> 32.
    return max(8, 32 // max(1, jnp.dtype(dtype).itemsize))


def _num_core_splits():
    """2 splits only on 2-TensorCore chips (v7x); 1 elsewhere (v5e/v6e)."""
    try:
        kind = jax.devices()[0].device_kind.lower()
    except Exception:
        return 1
    return 2 if ("v7" in kind or "7x" in kind) else 1


def _vreg_sum(a):
    """(R, 128) -> (8, 128) via layout-preserving VPU adds (no XLU)."""
    return jnp.sum(a.reshape(-1, 8, _LANES), axis=0)


def _focal_tversky_kernel(x_ref, t_ref, o_ref, xt_acc, x_acc, t_acc, *,
                          n, block_rows, blocks_per_split, needs_mask):
    c = pl.program_id(0)      # split (one per TensorCore when splits == 2)
    j = pl.program_id(1)      # reduction over row-blocks

    @pl.when(j == 0)
    def _():
        xt_acc[...] = jnp.zeros_like(xt_acc)
        x_acc[...] = jnp.zeros_like(x_acc)
        t_acc[...] = jnp.zeros_like(t_acc)

    x = jax.nn.sigmoid(x_ref[...].astype(jnp.float32))
    t = t_ref[...].astype(jnp.float32)

    def accumulate(xv, tv):
        xt_acc[...] += _vreg_sum(xv * tv)   # -> sum(sigmoid(x) * t)
        x_acc[...] += _vreg_sum(xv)         # -> sum(sigmoid(x))
        t_acc[...] += _vreg_sum(tv)         # -> sum(t)

    if needs_mask:
        block_elems = block_rows * _LANES
        block_idx = c * blocks_per_split + j          # raw (unclamped) block id
        base = block_idx * block_elems                # int32; ok for n < 2**31
        is_partial = (base + block_elems) > n

        # Interior blocks: no masking cost at all.
        @pl.when(jnp.logical_not(is_partial))
        def _():
            accumulate(x, t)

        # Tail block / duplicated clamped block: mask by flat element index.
        @pl.when(is_partial)
        def _():
            row = jax.lax.broadcasted_iota(jnp.int32, (block_rows, _LANES), 0)
            lane = jax.lax.broadcasted_iota(jnp.int32, (block_rows, _LANES), 1)
            valid = (base + row * _LANES + lane) < n
            accumulate(jnp.where(valid, x, 0.0), jnp.where(valid, t, 0.0))
    else:
        accumulate(x, t)

    @pl.when(j == pl.num_programs(1) - 1)
    def _():
        o_ref[0, 0] = jnp.sum(xt_acc[...])    # TP
        o_ref[0, 1] = jnp.sum(x_acc[...])     # sum(sigmoid(x))
        o_ref[0, 2] = jnp.sum(t_acc[...])     # sum(t)


def focal_tversky_loss(inputs, targets, smooth=1.0, alpha=0.5, beta=0.5,
                       gamma=1.0):
    """Pallas equivalent of FocalTverskyLoss.forward (returns scalar f32)."""
    x = jnp.ravel(inputs)
    t = jnp.ravel(targets)
    n = x.shape[0]

    # Only the (<128 element) lane tail is ever padded; otherwise the big
    # arrays are just reshaped row-major (no extra HBM pass, no dtype cast).
    lane_pad = (-n) % _LANES
    if lane_pad:
        x = jnp.pad(x, (0, lane_pad))
        t = jnp.pad(t, (0, lane_pad))
    rows = (n + lane_pad) // _LANES
    x2 = x.reshape(rows, _LANES)
    t2 = t.reshape(rows, _LANES)

    sub = max(_sublane_multiple(x2.dtype), _sublane_multiple(t2.dtype))
    block_rows = min(_MAX_BLOCK_ROWS, _round_up(rows, sub))
    total_blocks = pl.cdiv(rows, block_rows)

    num_splits = min(_num_core_splits(), total_blocks)
    blocks_per_split = pl.cdiv(total_blocks, num_splits)
    # Mask in-kernel whenever the (split, block) tiling over-covers n.
    needs_mask = (num_splits * blocks_per_split * block_rows * _LANES) != n

    def in_index_map(c, j):
        # Clamp so we never request a fully out-of-bounds block; the duplicate
        # block this can create is fully masked off inside the kernel.
        return (jnp.minimum(c * blocks_per_split + j, total_blocks - 1), 0)

    kernel = functools.partial(
        _focal_tversky_kernel,
        n=n, block_rows=block_rows,
        blocks_per_split=blocks_per_split, needs_mask=needs_mask)

    # 2 inputs x 2 pipeline buffers x block, plus small scratch + headroom.
    block_bytes = block_rows * _LANES * (x2.dtype.itemsize + t2.dtype.itemsize)
    vmem_limit = min(2 * block_bytes + (8 << 20), 64 << 20)

    dim_sem = ("parallel" if num_splits > 1 else "arbitrary", "arbitrary")

    cost = pl.CostEstimate(
        flops=6 * n,                     # mul + adds per element (approx.)
        transcendentals=n,               # one exp per element (sigmoid)
        bytes_accessed=int(x2.nbytes) + int(t2.nbytes) + 12 * num_splits)

    partials = pl.pallas_call(
        kernel,
        out_shape=jax.ShapeDtypeStruct((num_splits, 3), jnp.float32),
        grid_spec=pltpu.PrefetchScalarGridSpec(
            num_scalar_prefetch=0,
            grid=(num_splits, blocks_per_split),
            in_specs=[
                pl.BlockSpec((block_rows, _LANES), in_index_map),
                pl.BlockSpec((block_rows, _LANES), in_index_map),
            ],
            out_specs=pl.BlockSpec((1, 3), lambda c, j: (c, 0),
                                   memory_space=pltpu.SMEM),
            scratch_shapes=[
                pltpu.VMEM((8, _LANES), jnp.float32),  # running sum x*t
                pltpu.VMEM((8, _LANES), jnp.float32),  # running sum x
                pltpu.VMEM((8, _LANES), jnp.float32),  # running sum t
            ],
        ),
        compiler_params=pltpu.CompilerParams(
            dimension_semantics=dim_sem,
            vmem_limit_bytes=vmem_limit),
        cost_estimate=cost,
    )(x2, t2)

    # Combine per-split partials + scalar Tversky formula (a handful of scalar
    # ops; negligible outside the kernel).
    tp = partials[:, 0].sum()
    sx = partials[:, 1].sum()
    st = partials[:, 2].sum()
    fp = sx - tp
    fn = st - tp
    tversky = (tp + smooth) / (tp + alpha * fp + beta * fn + smooth)
    return jnp.maximum(1.0 - tversky, 0.0) ** gamma


def _reference(inputs, targets, smooth=1.0, alpha=0.5, beta=0.5, gamma=1.0):
    x = jax.nn.sigmoid(jnp.ravel(inputs).astype(jnp.float32))
    t = jnp.ravel(targets).astype(jnp.float32)
    tp = jnp.sum(x * t)
    fp = jnp.sum((1.0 - t) * x)
    fn = jnp.sum(t * (1.0 - x))
    tversky = (tp + smooth) / (tp + alpha * fp + beta * fn + smooth)
    return (1.0 - tversky) ** gamma


if __name__ == "__main__":
    key = jax.random.PRNGKey(0)
    k1, k2 = jax.random.split(key)
    # NCHW logits and binary targets, small shapes.
    x = jax.random.normal(k1, (2, 4, 16, 16), dtype=jnp.float32)
    t = (jax.random.uniform(k2, (2, 4, 16, 16)) > 0.5).astype(jnp.float32)

    loss = jax.block_until_ready(focal_tversky_loss(x, t))
    ref = jax.block_until_ready(_reference(x, t))
    assert jnp.allclose(loss, ref, atol=1e-5, rtol=1e-5), (loss, ref)
    print("KERNEL_OK")
</pallas_src>

<mosaic_0001>
module attributes {stable_mosaic.version = 11 : i64} {
  func.func @_focal_tversky_kernel(%arg0: i32, %arg1: i32, %arg2: memref<16x128xf32, #tpu.memory_space<vmem>>, %arg3: memref<16x128xf32, #tpu.memory_space<vmem>>, %arg4: memref<1x3xf32, #tpu.memory_space<smem>>, %arg5: memref<8x128xf32, #tpu.memory_space<vmem>>, %arg6: memref<8x128xf32, #tpu.memory_space<vmem>>, %arg7: memref<8x128xf32, #tpu.memory_space<vmem>>) attributes {dimension_semantics = [#tpu.dimension_semantics<arbitrary>, #tpu.dimension_semantics<arbitrary>], iteration_bounds = array<i64: 1, 1>, scalar_prefetch = 0 : i64, scratch_operands = 3 : i64, tpu.core_type = #tpu.core_type<tc>, window_params = [{transform_indices = @transform_0, window_bounds = array<i64: 16, 128>}, {transform_indices = @transform_1, window_bounds = array<i64: 16, 128>}, {transform_indices = @transform_2, window_bounds = array<i64: 1, 3>}]} {
    %c0_i32 = arith.constant 0 : i32
    %0 = arith.cmpi eq, %arg1, %c0_i32 : i32
    %1 = arith.extui %0 : i1 to i32
    %c0_i32_0 = arith.constant 0 : i32
    %2 = arith.cmpi ne, %1, %c0_i32_0 : i32
    scf.if %2 {
      %cst_21 = arith.constant 0.000000e+00 : f32
      %29 = vector.broadcast %cst_21 : f32 to vector<8x128xf32>
      %c0_22 = arith.constant 0 : index
      %c0_23 = arith.constant 0 : index
      %30 = vector.load %arg5[%c0_22, %c0_23] : memref<8x128xf32, #tpu.memory_space<vmem>>, vector<8x128xf32>
      tpu.vector_store %arg5[%c0_22, %c0_23], %29 {strides = array<i32>} : memref<8x128xf32, #tpu.memory_space<vmem>>, vector<8x128xf32>,
      %cst_24 = arith.constant 0.000000e+00 : f32
      %31 = vector.broadcast %cst_24 : f32 to vector<8x128xf32>
      %c0_25 = arith.constant 0 : index
      %c0_26 = arith.constant 0 : index
      %32 = vector.load %arg6[%c0_25, %c0_26] : memref<8x128xf32, #tpu.memory_space<vmem>>, vector<8x128xf32>
      tpu.vector_store %arg6[%c0_25, %c0_26], %31 {strides = array<i32>} : memref<8x128xf32, #tpu.memory_space<vmem>>, vector<8x128xf32>,
      %cst_27 = arith.constant 0.000000e+00 : f32
      %33 = vector.broadcast %cst_27 : f32 to vector<8x128xf32>
      %c0_28 = arith.constant 0 : index
      %c0_29 = arith.constant 0 : index
      %34 = vector.load %arg7[%c0_28, %c0_29] : memref<8x128xf32, #tpu.memory_space<vmem>>, vector<8x128xf32>
      tpu.vector_store %arg7[%c0_28, %c0_29], %33 {strides = array<i32>} : memref<8x128xf32, #tpu.memory_space<vmem>>, vector<8x128xf32>,
    } else {
    }
    %c0 = arith.constant 0 : index
    %c0_1 = arith.constant 0 : index
    %3 = vector.load %arg2[%c0, %c0_1] : memref<16x128xf32, #tpu.memory_space<vmem>>, vector<16x128xf32>
    %4 = arith.negf %3 : vector<16x128xf32>
    %5 = math.exp %4 : vector<16x128xf32>
    %cst = arith.constant 1.000000e+00 : f32
    %6 = vector.broadcast %cst : f32 to vector<16x128xf32>
    %7 = arith.addf %6, %5 : vector<16x128xf32>
    %8 = arith.divf %6, %7 : vector<16x128xf32>
    %c0_2 = arith.constant 0 : index
    %c0_3 = arith.constant 0 : index
    %9 = vector.load %arg3[%c0_2, %c0_3] : memref<16x128xf32, #tpu.memory_space<vmem>>, vector<16x128xf32>
    %c0_4 = arith.constant 0 : index
    %c0_5 = arith.constant 0 : index
    %10 = vector.load %arg5[%c0_4, %c0_5] : memref<8x128xf32, #tpu.memory_space<vmem>>, vector<8x128xf32>
    %11 = arith.mulf %8, %9 : vector<16x128xf32>
    %12 = vector.shape_cast %11 : vector<16x128xf32> to vector<2x8x128xf32>
    %cst_6 = arith.constant dense<0.000000e+00> : vector<8x128xf32>
    %13 = vector.multi_reduction <add>, %12, %cst_6 [0] : vector<2x8x128xf32> to vector<8x128xf32>
    %14 = arith.addf %10, %13 : vector<8x128xf32>
    %c0_7 = arith.constant 0 : index
    %c0_8 = arith.constant 0 : index
    %15 = vector.load %arg5[%c0_7, %c0_8] : memref<8x128xf32, #tpu.memory_space<vmem>>, vector<8x128xf32>
    tpu.vector_store %arg5[%c0_7, %c0_8], %14 {strides = array<i32>} : memref<8x128xf32, #tpu.memory_space<vmem>>, vector<8x128xf32>,
    %c0_9 = arith.constant 0 : index
    %c0_10 = arith.constant 0 : index
    %16 = vector.load %arg6[%c0_9, %c0_10] : memref<8x128xf32, #tpu.memory_space<vmem>>, vector<8x128xf32>
    %17 = vector.shape_cast %8 : vector<16x128xf32> to vector<2x8x128xf32>
    %cst_11 = arith.constant dense<0.000000e+00> : vector<8x128xf32>
    %18 = vector.multi_reduction <add>, %17, %cst_11 [0] : vector<2x8x128xf32> to vector<8x128xf32>
    %19 = arith.addf %16, %18 : vector<8x128xf32>
    %c0_12 = arith.constant 0 : index
    %c0_13 = arith.constant 0 : index
    %20 = vector.load %arg6[%c0_12, %c0_13] : memref<8x128xf32, #tpu.memory_space<vmem>>, vector<8x128xf32>
    tpu.vector_store %arg6[%c0_12, %c0_13], %19 {strides = array<i32>} : memref<8x128xf32, #tpu.memory_space<vmem>>, vector<8x128xf32>,
    %c0_14 = arith.constant 0 : index
    %c0_15 = arith.constant 0 : index
    %21 = vector.load %arg7[%c0_14, %c0_15] : memref<8x128xf32, #tpu.memory_space<vmem>>, vector<8x128xf32>
    %22 = vector.shape_cast %9 : vector<16x128xf32> to vector<2x8x128xf32>
    %cst_16 = arith.constant dense<0.000000e+00> : vector<8x128xf32>
    %23 = vector.multi_reduction <add>, %22, %cst_16 [0] : vector<2x8x128xf32> to vector<8x128xf32>
    %24 = arith.addf %21, %23 : vector<8x128xf32>
    %c0_17 = arith.constant 0 : index
    %c0_18 = arith.constant 0 : index
    %25 = vector.load %arg7[%c0_17, %c0_18] : memref<8x128xf32, #tpu.memory_space<vmem>>, vector<8x128xf32>
    tpu.vector_store %arg7[%c0_17, %c0_18], %24 {strides = array<i32>} : memref<8x128xf32, #tpu.memory_space<vmem>>, vector<8x128xf32>,
    %c0_i32_19 = arith.constant 0 : i32
    %26 = arith.cmpi eq, %arg1, %c0_i32_19 : i32
    %27 = arith.extui %26 : i1 to i32
    %c0_i32_20 = arith.constant 0 : i32
    %28 = arith.cmpi ne, %27, %c0_i32_20 : i32
    scf.if %28 {
      %c0_21 = arith.constant 0 : index
      %c0_22 = arith.constant 0 : index
      %29 = vector.load %arg5[%c0_21, %c0_22] : memref<8x128xf32, #tpu.memory_space<vmem>>, vector<8x128xf32>
      %30 = vector.shape_cast %29 : vector<8x128xf32> to vector<1x8x128xf32>
      %cst_23 = arith.constant dense<0.000000e+00> : vector<1xf32>
      %31 = vector.multi_reduction <add>, %30, %cst_23 [1, 2] : vector<1x8x128xf32> to vector<1xf32>
      %32 = vector.shape_cast %31 : vector<1xf32> to vector<1x1x1xf32>
      %33 = vector.extract %32[0, 0, 0] : f32 from vector<1x1x1xf32>
      %c0_24 = arith.constant 0 : index
      %c0_25 = arith.constant 0 : index
      %34 = memref.load %arg4[%c0_24, %c0_25] : memref<1x3xf32, #tpu.memory_space<smem>>
      memref.store %33, %arg4[%c0_24, %c0_25] : memref<1x3xf32, #tpu.memory_space<smem>>
      %c0_26 = arith.constant 0 : index
      %c0_27 = arith.constant 0 : index
      %35 = vector.load %arg6[%c0_26, %c0_27] : memref<8x128xf32, #tpu.memory_space<vmem>>, vector<8x128xf32>
      %36 = vector.shape_cast %35 : vector<8x128xf32> to vector<1x8x128xf32>
      %cst_28 = arith.constant dense<0.000000e+00> : vector<1xf32>
      %37 = vector.multi_reduction <add>, %36, %cst_28 [1, 2] : vector<1x8x128xf32> to vector<1xf32>
      %38 = vector.shape_cast %37 : vector<1xf32> to vector<1x1x1xf32>
      %39 = vector.extract %38[0, 0, 0] : f32 from vector<1x1x1xf32>
      %c0_29 = arith.constant 0 : index
      %c1 = arith.constant 1 : index
      %40 = memref.load %arg4[%c0_29, %c1] : memref<1x3xf32, #tpu.memory_space<smem>>
      memref.store %39, %arg4[%c0_29, %c1] : memref<1x3xf32, #tpu.memory_space<smem>>
      %c0_30 = arith.constant 0 : index
      %c0_31 = arith.constant 0 : index
      %41 = vector.load %arg7[%c0_30, %c0_31] : memref<8x128xf32, #tpu.memory_space<vmem>>, vector<8x128xf32>
      %42 = vector.shape_cast %41 : vector<8x128xf32> to vector<1x8x128xf32>
      %cst_32 = arith.constant dense<0.000000e+00> : vector<1xf32>
      %43 = vector.multi_reduction <add>, %42, %cst_32 [1, 2] : vector<1x8x128xf32> to vector<1xf32>
      %44 = vector.shape_cast %43 : vector<1xf32> to vector<1x1x1xf32>
      %45 = vector.extract %44[0, 0, 0] : f32 from vector<1x1x1xf32>
      %c0_33 = arith.constant 0 : index
      %c2 = arith.constant 2 : index
      %46 = memref.load %arg4[%c0_33, %c2] : memref<1x3xf32, #tpu.memory_space<smem>>
      memref.store %45, %arg4[%c0_33, %c2] : memref<1x3xf32, #tpu.memory_space<smem>>
    } else {
    }
    return
  }
  func.func @transform_0(%arg0: i32, %arg1: i32) -> (i32, i32) {
    %c1_i32 = arith.constant 1 : i32
    %0 = arith.muli %arg0, %c1_i32 : i32
    %1 = arith.addi %0, %arg1 : i32
    %c0_i32 = arith.constant 0 : i32
    %2 = arith.minsi %1, %c0_i32 : i32
    %c0_i32_0 = arith.constant 0 : i32
    %c0_i32_1 = arith.constant 0 : i32
    return %2, %c0_i32_0 : i32, i32
  }
  func.func @transform_1(%arg0: i32, %arg1: i32) -> (i32, i32) {
    %c1_i32 = arith.constant 1 : i32
    %0 = arith.muli %arg0, %c1_i32 : i32
    %1 = arith.addi %0, %arg1 : i32
    %c0_i32 = arith.constant 0 : i32
    %2 = arith.minsi %1, %c0_i32 : i32
    %c0_i32_0 = arith.constant 0 : i32
    %c0_i32_1 = arith.constant 0 : i32
    return %2, %c0_i32_0 : i32, i32
  }
  func.func @transform_2(%arg0: i32, %arg1: i32) -> (i32, i32) {
    %c0_i32 = arith.constant 0 : i32
    %c0_i32_0 = arith.constant 0 : i32
    return %arg0, %c0_i32 : i32, i32
  }
}

</mosaic_0001>

<llo_original>
// kernel: tpu_custom_call.1
$region0: #{tpu_custom_call.1}
  #allocation0 [shape = 'u32[]', space=smem, size = 0x4, offset = 0x4, fixed_abs, tag = 'smem constant byte address 0x4 - core index']
  #allocation1 [shape = 'u32[72,128]{1,0:T(1,128)}', space=vmem, size = 0x9000, scoped, tag = 'internal scratch']
  #allocation2 [shape = 'f32[8,128]{1,0:T(8,128)}', space=vmem, size = 0x1000, scoped, tag = 'scratch operand']
  #allocation3 [shape = 'f32[8,128]{1,0:T(8,128)}', space=vmem, size = 0x1000, scoped, tag = 'scratch operand']
  #allocation4 [shape = 'f32[8,128]{1,0:T(8,128)}', space=vmem, size = 0x1000, scoped, tag = 'scratch operand']
  %s0 = inlined_call_operand.hbm [shape: f32[16,128], index: 0, kind: input, shape index: {}]
  %s1 = inlined_call_operand.hbm [shape: f32[16,128], index: 1, kind: input, shape index: {}]
  %s2 = inlined_call_operand.hbm [shape: f32[1,3], index: 2, kind: output, shape index: {}]
  %s3 = sld [smem:[#allocation0]]
  $region34: #{tpu_custom_call.1} parent=0
    _
  %s5 = ssub.s32 1, %s3
  %s6 = scalar_select 0, %s5, %s3
  $region1: #{tpu_custom_call.1} parent=0
    #allocation5 [shape = 'u8[8192]{0}', space=vmem, size = 0x2000, scoped, tag = 'input window, operand 0, single buffered']
    #allocation6 [shape = 's32[1]{0}', space=sflag, size = 0x4, scoped, tag = 'scoped memory for tpu_custom_call.1']
    #allocation7 [shape = 's32[1]{0}', space=sflag, size = 0x4, scoped, tag = 'scoped memory for tpu_custom_call.1']
    #allocation8 [shape = 'u8[8192]{0}', space=vmem, size = 0x2000, scoped, tag = 'input window, operand 1, single buffered']
    #allocation9 [shape = 's32[1]{0}', space=sflag, size = 0x4, scoped, tag = 'scoped memory for tpu_custom_call.1']
    #allocation10 [shape = 'u8[512]{0}', space=smem, size = 0x200, scoped, tag = 'output window, operand 0, single buffered']
    %7 = vsyncpa [#allocation6], 0
    %8 = vsyncpa [#allocation9], 0
    %9 = vsyncpa [#allocation7], 0
    // Predicated region
    $region2: #{tpu_custom_call.1} parent=1 // pred_check
      _
    $region3: #{tpu_custom_call.1} parent=1 // pred_check_branch
      %11 = sbr.rel (0) target = $region5
    $region4: #{tpu_custom_call.1} parent=1 // pred_region
      %s12 = sadd.s32 0, 0
      %p13 = scmp.lt.s32.totalorder %s12, 0
      %s14 = scalar_select %p13, %s12, 0
      %s15 = smul.u32 2, %s14
      %17 = vsyncadd [#allocation6], 0
      %s18 = smul.addr %s15, 8
      %s19 = scalar_lea.hbm %s0, %s18
      %s20 = sshll.u32 %s19, 4
      %s21 = int_to_ptr.hbm [resolvable:$true] %s20
      %s22 = sshll.u32 [#allocation5], 4
      %s23 = int_to_ptr.vmem [resolvable:$true] %s22
      %28 = dma.hbm_to_vmem [thread:$0]  %s21, 256, %s23, [#allocation6], 128, 128, 8
    $region5: #{tpu_custom_call.1} parent=1 // pred_fallthru
      _
    // Predicated region
    $region6: #{tpu_custom_call.1} parent=1 // pred_check
      _
    $region7: #{tpu_custom_call.1} parent=1 // pred_check_branch
      %30 = sbr.rel (0) target = $region9
    $region8: #{tpu_custom_call.1} parent=1 // pred_region
      %s31 = sadd.s32 0, 0
      %p32 = scmp.lt.s32.totalorder %s31, 0
      %s33 = scalar_select %p32, %s31, 0
      %s34 = smul.u32 2, %s33
      %36 = vsyncadd [#allocation9], 0
      %s37 = smul.addr %s34, 8
      %s38 = scalar_lea.hbm %s1, %s37
      %s39 = sshll.u32 %s38, 4
      %s40 = int_to_ptr.hbm [resolvable:$true] %s39
      %s41 = sshll.u32 [#allocation8], 4
      %s42 = int_to_ptr.vmem [resolvable:$true] %s41
      %47 = dma.hbm_to_vmem [thread:$0]  %s40, 256, %s42, [#allocation9], 128, 128, 8
    $region9: #{tpu_custom_call.1} parent=1 // pred_fallthru
      _
    // Predicated region
    $region10: #{tpu_custom_call.1} parent=1 // pred_check
      _
    $region11: #{tpu_custom_call.1} parent=1 // pred_check_branch
      %49 = sbr.rel (0) target = $region13
    $region12: #{tpu_custom_call.1} parent=1 // pred_region
      %51 = dma.done [#allocation6], 256
    $region13: #{tpu_custom_call.1} parent=1 // pred_fallthru
      _
    // Predicated region
    $region14: #{tpu_custom_call.1} parent=1 // pred_check
      _
    $region15: #{tpu_custom_call.1} parent=1 // pred_check_branch
      %53 = sbr.rel (0) target = $region17
    $region16: #{tpu_custom_call.1} parent=1 // pred_region
      %55 = dma.done [#allocation9], 256
    $region17: #{tpu_custom_call.1} parent=1 // pred_fallthru
      _
    %s56 = sadd.s32 0, 0
    %p57 = scmp.lt.s32.totalorder %s56, 0
    %s58 = scalar_select %p57, %s56, 0
    %s59 = smul.u32 2, %s58
    %s60 = sadd.s32 0, 0
    %p61 = scmp.lt.s32.totalorder %s60, 0
    %s62 = scalar_select %p61, %s60, 0
    %s63 = smul.u32 2, %s62
    %p64 = scmp.eq.s32.totalorder 0, 0
    // Predicated region
    $region18: #{tpu_custom_call.1} parent=1 // pred_check
      %p65 = pneg %p64
    $region19: #{tpu_custom_call.1} parent=1 // pred_check_branch
      %67 = sbr.rel (%p65) target = $region21
    $region20: #{tpu_custom_call.1} parent=1 // pred_region
      %68 = vst [vmem:[#allocation2] sm:$0xff] 0.0
      %69 = vst [vmem:[#allocation3] sm:$0xff] 0.0
      %70 = vst [vmem:[#allocation4] sm:$0xff] 0.0
    $region21: #{tpu_custom_call.1} parent=1 // pred_fallthru
      _
    %v71 = vld [vmem:[#allocation5] sm:$0xff]
    %v72 = vld [vmem:[#allocation5 + $0x8] sm:$0xff]
    %v73 = vxor.u32 %v71, 2147483648
    %v74 = vxor.u32 %v72, 2147483648
    %v75 = vmul.f32 %v73, 1.442695
    %v76 = vpow.pop %v75
    %v77 = vmul.f32 %v74, 1.442695
    %v78 = vpow.pop %v77
    %v79 = vadd.f32 %v76, 1.0
    %v80 = vadd.f32 %v78, 1.0
    %v81 = vrcp.pop %v79
    %v82 = vmul.f32 %v79, %v81
    %v83 = vsub.f32 1.0, %v82
    %v84 = vmul.f32 %v81, %v83
    %v85 = vadd.f32 %v81, %v84
    %vm86 = vweird.f32 %v79
    %vm87 = vweird.f32 %v81
    %vm88 = vmor %vm86, %vm87
    %v89 = vsel %vm88, %v81, %v85
    %v90 = vand.u32 2147483647, %v79
    %vm91 = vcmp.eq.f32.partialorder %v90, 8.507059e+37
    %v92 = vand.u32 %v79, 2147483648
    %v93 = vor.u32 1.1754944e-38, %v92
    %v94 = vsel %vm91, %v93, %v89
    %v95 = vmul.f32 1.0, %v94
    %v96 = vrcp.pop %v80
    %v97 = vmul.f32 %v80, %v96
    %v98 = vsub.f32 1.0, %v97
    %v99 = vmul.f32 %v96, %v98
    %v100 = vadd.f32 %v96, %v99
    %vm101 = vweird.f32 %v80
    %vm102 = vweird.f32 %v96
    %vm103 = vmor %vm101, %vm102
    %v104 = vsel %vm103, %v96, %v100
    %v105 = vand.u32 2147483647, %v80
    %vm106 = vcmp.eq.f32.partialorder %v105, 8.507059e+37
    %v107 = vand.u32 %v80, 2147483648
    %v108 = vor.u32 1.1754944e-38, %v107
    %v109 = vsel %vm106, %v108, %v104
    %v110 = vmul.f32 1.0, %v109
    %v111 = vld [vmem:[#allocation8] sm:$0xff]
    %v112 = vld [vmem:[#allocation8 + $0x8] sm:$0xff]
    %v113 = vld [vmem:[#allocation2] sm:$0xff]
    %v114 = vmul.f32 %v95, %v111
    %v115 = vmul.f32 %v110, %v112
    %v116 = vadd.f32 %v114, %v115
    %v117 = vadd.f32 %v113, %v116
    %118 = vst [vmem:[#allocation2] sm:$0xff] %v117
    %v119 = vld [vmem:[#allocation3] sm:$0xff]
    %v120 = vadd.f32 %v95, %v110
    %v121 = vadd.f32 %v119, %v120
    %122 = vst [vmem:[#allocation3] sm:$0xff] %v121
    %v123 = vld [vmem:[#allocation4] sm:$0xff]
    %v124 = vadd.f32 %v111, %v112
    %v125 = vadd.f32 %v123, %v124
    %126 = vst [vmem:[#allocation4] sm:$0xff] %v125
    // Predicated region
    $region22: #{tpu_custom_call.1} parent=1 // pred_check
      %p127 = pneg %p64
    $region23: #{tpu_custom_call.1} parent=1 // pred_check_branch
      %129 = sbr.rel (%p127) target = $region25
    $region24: #{tpu_custom_call.1} parent=1 // pred_region
      %v130 = vld [vmem:[#allocation2] sm:$0xff]
      %131 = vadd.xlane.f32.xlu0 %v130
      %v132 = vpop.xlane.xlu0 %131
      %v133 = vrot.slane %v132, 4
      %v134 = vadd.f32 %v132, %v133
      %v135 = vrot.slane %v134, 2
      %v136 = vadd.f32 %v134, %v135
      %v137 = vrot.slane %v136, 1
      %v138 = vadd.f32 %v136, %v137
      %s139 = vtos %v138
      %s140 = scalar_lea.smem [#allocation10], 0
      %141 = sst [smem:[%s140]] %s139
      %v142 = vld [vmem:[#allocation3] sm:$0xff]
      %143 = vadd.xlane.f32.xlu0 %v142
      %v144 = vpop.xlane.xlu0 %143
      %v145 = vrot.slane %v144, 4
      %v146 = vadd.f32 %v144, %v145
      %v147 = vrot.slane %v146, 2
      %v148 = vadd.f32 %v146, %v147
      %v149 = vrot.slane %v148, 1
      %v150 = vadd.f32 %v148, %v149
      %s151 = vtos %v150
      %s152 = scalar_lea.smem [#allocation10], 1
      %153 = sst [smem:[%s152]] %s151
      %v154 = vld [vmem:[#allocation4] sm:$0xff]
      %155 = vadd.xlane.f32.xlu0 %v154
      %v156 = vpop.xlane.xlu0 %155
      %v157 = vrot.slane %v156, 4
      %v158 = vadd.f32 %v156, %v157
      %v159 = vrot.slane %v158, 2
      %v160 = vadd.f32 %v158, %v159
      %v161 = vrot.slane %v160, 1
      %v162 = vadd.f32 %v160, %v161
      %s163 = vtos %v162
      %s164 = scalar_lea.smem [#allocation10], 2
      %165 = sst [smem:[%s164]] %s163
    $region25: #{tpu_custom_call.1} parent=1 // pred_fallthru
      _
    // Predicated region
    $region26: #{tpu_custom_call.1} parent=1 // pred_check
      _
    $region27: #{tpu_custom_call.1} parent=1 // pred_check_branch
      %167 = sbr.rel (0) target = $region29
    $region28: #{tpu_custom_call.1} parent=1 // pred_region
      %169 = vsyncadd [#allocation7], 0
      %s171 = sshll.u32 %s2, 4
      %s172 = int_to_ptr.hbm [resolvable:$true] %s171
      %174 = dma.smem_to_hbm [#allocation10], 16, %s172, [#allocation7]
    $region29: #{tpu_custom_call.1} parent=1 // pred_fallthru
      _
    // Predicated region
    $region30: #{tpu_custom_call.1} parent=1 // pred_check
      _
    $region31: #{tpu_custom_call.1} parent=1 // pred_check_branch
      %176 = sbr.rel (0) target = $region33
    $region32: #{tpu_custom_call.1} parent=1 // pred_region
      %178 = dma.done [#allocation7], 16
    $region33: #{tpu_custom_call.1} parent=1 // pred_fallthru
      _
    %179 = sfence
    %180 = vsyncpa [#allocation6], 1
    %181 = vsyncpa [#allocation9], 1
    %182 = vsyncpa [#allocation7], 1

</llo_original>
